<compile_context>
chip_gen: v5e
topology: v5e:2x2
jax: 0.10.0
libtpu: 0.0.40
codegen_flags: <defaults>
</compile_context>

<pallas_src>
import functools

import jax
import jax.numpy as jnp
from jax.experimental import pallas as pl
from jax.experimental.pallas import tpu as pltpu


def _round_up(x, m):
    return ((x + m - 1) // m) * m


def kan_kernel(xk_ref, wc_ref, ws_ref, b_ref, o_ref):
    # xk_ref: (bt, HD_pad)     f32 pre-scaled angles, xk[b, h*D+d] = (h+1)*x[b,d]
    # wc_ref: (HD_pad, O_pad)  bf16 cos coefficients (rows h-slow, d-fast)
    # ws_ref: (HD_pad, O_pad)  bf16 sin coefficients
    # b_ref : (1, O_pad)       f32 bias (zero-padded)
    # o_ref : (bt, O_pad)      f32 output block (lane-dense)
    xk = xk_ref[...]                                # VMEM load, f32
    # Keep the argument in f32 (safe range reduction); cast the EUP results to
    # bf16 only to feed the MXU.
    cos_f = jnp.cos(xk).astype(wc_ref.dtype)        # EUP
    sin_f = jnp.sin(xk).astype(ws_ref.dtype)        # EUP
    # Two lane-aligned MXU contractions, f32 accumulate -- no concat, no pad.
    y = jnp.dot(cos_f, wc_ref[...], preferred_element_type=jnp.float32)
    y = y + jnp.dot(sin_f, ws_ref[...], preferred_element_type=jnp.float32)
    o_ref[...] = (y + b_ref[...]).astype(o_ref.dtype)


def prepare_kan_params(fourier_coeffs, bias, num_harmonics,
                       compute_dtype=jnp.bfloat16):
    """One-time parameter preparation (module-init time, off the hot path).

    fourier_coeffs: (2, O, D, H); bias: (1, O).
    Returns (w_cos, w_sin, b, k_vec):
      w_cos, w_sin: (HD_pad, O_pad) compute_dtype, rows h-slow / d-fast.
      b:            (1, O_pad) f32 (zero-padded).
      k_vec:        (H,) f32 harmonic indices 1..H.
    """
    O, D = fourier_coeffs.shape[1], fourier_coeffs.shape[2]
    H = num_harmonics
    HD = H * D
    HD_pad = _round_up(HD, 16)             # bf16 sublane multiple
    O_pad = _round_up(O, 128)              # lane-dense output stores
    # (O, D, H) -> (H, D, O) -> (H*D, O): row h*D + d pairs with (h+1)*x_d.
    w_cos = jnp.transpose(fourier_coeffs[0], (2, 1, 0)).reshape(HD, O)
    w_sin = jnp.transpose(fourier_coeffs[1], (2, 1, 0)).reshape(HD, O)
    w_cos = jnp.pad(w_cos, ((0, HD_pad - HD), (0, O_pad - O))).astype(compute_dtype)
    w_sin = jnp.pad(w_sin, ((0, HD_pad - HD), (0, O_pad - O))).astype(compute_dtype)
    b = jnp.pad(bias.astype(jnp.float32), ((0, 0), (0, O_pad - O)))
    k_vec = jnp.arange(1, H + 1, dtype=jnp.float32)
    return w_cos, w_sin, b, k_vec


@functools.partial(jax.jit, static_argnames=("output_dim", "batch_tile"))
def kan_forward(x, w_cos, w_sin, b, k_vec, *, output_dim, batch_tile=None):
    """x: (B, D) f32; params from prepare_kan_params.  Returns (B, output_dim) f32."""
    B, D = x.shape
    H = k_vec.shape[0]
    HD = H * D
    HD_pad, O_pad = w_cos.shape

    # Fuse the ×H lane replication and the harmonic scaling into one XLA
    # broadcast (no in-kernel XLU concat, no separate k-multiply pass):
    #   xk[b, h*D + d] = (h + 1) * x[b, d]     (h-slow, d-fast).
    xk = (x[:, None, :] * k_vec[None, :, None]).reshape(B, HD)
    if HD_pad != HD:
        # Zero angle lanes pair with zero-padded weight rows -> no contribution.
        xk = jnp.pad(xk, ((0, 0), (0, HD_pad - HD)))

    if batch_tile is None:
        # Large tile to amortize per-grid-step overhead.  Per-step working set
        # (2x (bt, HD_pad) f32 in, 2x (bt, O_pad) f32 out, tiny weights) is a
        # few MiB at bt=1024 -- fits every generation's scoped VMEM.
        batch_tile = min(1024, _round_up(B, 8))
    B_pad = _round_up(B, batch_tile)
    if B_pad != B:
        xk = jnp.pad(xk, ((0, B_pad - B), (0, 0)))

    grid = (B_pad // batch_tile,)
    out = pl.pallas_call(
        kan_kernel,
        out_shape=jax.ShapeDtypeStruct((B_pad, O_pad), jnp.float32),
        grid=grid,
        in_specs=[
            pl.BlockSpec((batch_tile, HD_pad), lambda i: (i, 0)),
            pl.BlockSpec((HD_pad, O_pad), lambda i: (0, 0)),
            pl.BlockSpec((HD_pad, O_pad), lambda i: (0, 0)),
            pl.BlockSpec((1, O_pad), lambda i: (0, 0)),
        ],
        out_specs=pl.BlockSpec((batch_tile, O_pad), lambda i: (i, 0)),
        compiler_params=pltpu.CompilerParams(
            # Batch axis is embarrassingly parallel (harmless on v5e/v6e).
            # TODO(synk): on v7x, verify both TensorCores engage; if not,
            # switch this axis to pltpu.CORE_PARALLEL.
            dimension_semantics=("parallel",),
            vmem_limit_bytes=32 * 1024 * 1024,
        ),
    )(xk, w_cos, w_sin, b)
    # TODO(synk): if the consumer can take the padded (B_pad, O_pad) slab,
    # skip this slice to avoid an extra XLA pass over the output.
    return out[:B, :output_dim]


def kan_reference(x, fourier_coeffs, bias, num_harmonics):
    """Pure-JAX reference mirroring the PyTorch forward exactly (f32)."""
    B, D = x.shape
    H = num_harmonics
    xr = x.reshape(B, D, 1)
    k = jnp.arange(1, H + 1, dtype=x.dtype).reshape(1, 1, H)
    cos_terms = jnp.cos(k * xr)
    sin_terms = jnp.sin(k * xr)
    y_cos = jnp.einsum("bij,oij->bo", cos_terms, fourier_coeffs[0])
    y_sin = jnp.einsum("bij,oij->bo", sin_terms, fourier_coeffs[1])
    return y_cos + y_sin + bias


if __name__ == "__main__":
    # Small, deterministic problem sizes consistent with the module.
    batch = 8
    input_dim = 16
    output_dim = 32
    num_harmonics = 5

    key = jax.random.PRNGKey(0)
    kx, kw = jax.random.split(key)
    x = jax.random.normal(kx, (batch, input_dim), dtype=jnp.float32)
    fourier_coeffs = 0.1 * jax.random.normal(
        kw, (2, output_dim, input_dim, num_harmonics), dtype=jnp.float32
    )
    bias = jnp.zeros((1, output_dim), dtype=jnp.float32)  # nn.Parameter(torch.zeros(1, O))

    # One-time parameter preparation (module-init time in the PyTorch model).
    w_cos, w_sin, b, k_vec = prepare_kan_params(fourier_coeffs, bias, num_harmonics)

    out = kan_forward(x, w_cos, w_sin, b, k_vec, output_dim=output_dim)
    out = jax.block_until_ready(out)

    ref = kan_reference(x, fourier_coeffs, bias, num_harmonics)
    assert out.shape == (batch, output_dim)
    # bf16-fed MXU (f32 accumulate) vs pure-f32 reference -> loosened tolerance.
    max_err = float(jnp.max(jnp.abs(out - ref)))
    assert jnp.allclose(out, ref, atol=5e-2, rtol=5e-2), (
        f"Pallas output mismatch vs reference, max abs err = {max_err}"
    )

    print("KERNEL_OK")
</pallas_src>

<mosaic_0001>
module attributes {stable_mosaic.version = 11 : i64} {
  func.func @kan_kernel(%arg0: i32, %arg1: memref<8x80xf32, #tpu.memory_space<vmem>>, %arg2: memref<80x128xbf16, #tpu.memory_space<vmem>>, %arg3: memref<80x128xbf16, #tpu.memory_space<vmem>>, %arg4: memref<1x128xf32, #tpu.memory_space<vmem>>, %arg5: memref<8x128xf32, #tpu.memory_space<vmem>>) attributes {dimension_semantics = [#tpu.dimension_semantics<parallel>], iteration_bounds = array<i64: 1>, scalar_prefetch = 0 : i64, scratch_operands = 0 : i64, tpu.core_type = #tpu.core_type<tc>, window_params = [{transform_indices = @transform_0, window_bounds = array<i64: 8, 80>}, {pipeline_mode = #tpu.pipeline_mode<synchronous>, transform_indices = @transform_1, window_bounds = array<i64: 80, 128>}, {pipeline_mode = #tpu.pipeline_mode<synchronous>, transform_indices = @transform_2, window_bounds = array<i64: 80, 128>}, {pipeline_mode = #tpu.pipeline_mode<synchronous>, transform_indices = @transform_3, window_bounds = array<i64: 1, 128>}, {transform_indices = @transform_4, window_bounds = array<i64: 8, 128>}]} {
    %c0 = arith.constant 0 : index
    %c0_0 = arith.constant 0 : index
    %0 = vector.load %arg1[%c0, %c0_0] : memref<8x80xf32, #tpu.memory_space<vmem>>, vector<8x80xf32>
    %1 = math.cos %0 : vector<8x80xf32>
    %2 = arith.truncf %1 : vector<8x80xf32> to vector<8x80xbf16>
    %3 = math.sin %0 : vector<8x80xf32>
    %4 = arith.truncf %3 : vector<8x80xf32> to vector<8x80xbf16>
    %c0_1 = arith.constant 0 : index
    %c0_2 = arith.constant 0 : index
    %5 = vector.load %arg2[%c0_1, %c0_2] : memref<80x128xbf16, #tpu.memory_space<vmem>>, vector<80x128xbf16>
    %cst = arith.constant dense<0.000000e+00> : vector<8x128xf32>
    %6 = tpu.matmul %2, %5, %cst {dimension_numbers = #tpu.dot_dimension_numbers<[1], [0], [0], [1], [0, 0, 1, 1], [], []>} : vector<8x80xbf16>, vector<80x128xbf16>, vector<8x128xf32> -> vector<8x128xf32>
    %c0_3 = arith.constant 0 : index
    %c0_4 = arith.constant 0 : index
    %7 = vector.load %arg3[%c0_3, %c0_4] : memref<80x128xbf16, #tpu.memory_space<vmem>>, vector<80x128xbf16>
    %cst_5 = arith.constant dense<0.000000e+00> : vector<8x128xf32>
    %8 = tpu.matmul %4, %7, %cst_5 {dimension_numbers = #tpu.dot_dimension_numbers<[1], [0], [0], [1], [0, 0, 1, 1], [], []>} : vector<8x80xbf16>, vector<80x128xbf16>, vector<8x128xf32> -> vector<8x128xf32>
    %9 = arith.addf %6, %8 : vector<8x128xf32>
    %c0_6 = arith.constant 0 : index
    %c0_7 = arith.constant 0 : index
    %10 = vector.load %arg4[%c0_6, %c0_7] : memref<1x128xf32, #tpu.memory_space<vmem>>, vector<1x128xf32>
    %11 = vector.broadcast %10 : vector<1x128xf32> to vector<8x128xf32>
    %12 = arith.addf %9, %11 : vector<8x128xf32>
    %c0_8 = arith.constant 0 : index
    %c0_9 = arith.constant 0 : index
    %13 = vector.load %arg5[%c0_8, %c0_9] : memref<8x128xf32, #tpu.memory_space<vmem>>, vector<8x128xf32>
    tpu.vector_store %arg5[%c0_8, %c0_9], %12 {strides = array<i32>} : memref<8x128xf32, #tpu.memory_space<vmem>>, vector<8x128xf32>,
    return
  }
  func.func @transform_0(%arg0: i32) -> (i32, i32) {
    %c0_i32 = arith.constant 0 : i32
    %c0_i32_0 = arith.constant 0 : i32
    return %arg0, %c0_i32 : i32, i32
  }
  func.func @transform_1(%arg0: i32) -> (i32, i32) {
    %c0_i32 = arith.constant 0 : i32
    %c0_i32_0 = arith.constant 0 : i32
    %c0_i32_1 = arith.constant 0 : i32
    return %c0_i32, %c0_i32_0 : i32, i32
  }
  func.func @transform_2(%arg0: i32) -> (i32, i32) {
    %c0_i32 = arith.constant 0 : i32
    %c0_i32_0 = arith.constant 0 : i32
    %c0_i32_1 = arith.constant 0 : i32
    return %c0_i32, %c0_i32_0 : i32, i32
  }
  func.func @transform_3(%arg0: i32) -> (i32, i32) {
    %c0_i32 = arith.constant 0 : i32
    %c0_i32_0 = arith.constant 0 : i32
    %c0_i32_1 = arith.constant 0 : i32
    return %c0_i32, %c0_i32_0 : i32, i32
  }
  func.func @transform_4(%arg0: i32) -> (i32, i32) {
    %c0_i32 = arith.constant 0 : i32
    %c0_i32_0 = arith.constant 0 : i32
    return %arg0, %c0_i32 : i32, i32
  }
}

</mosaic_0001>

<llo_original>
// kernel: kan_forward.1
$region0: #{kan_forward.1}
  #allocation0 [shape = 'u32[]', space=smem, size = 0x4, offset = 0x4, fixed_abs, tag = 'smem constant byte address 0x4 - core index']
  #allocation1 [shape = 'u32[72,128]{1,0:T(1,128)}', space=vmem, size = 0x9000, scoped, tag = 'internal scratch']
  %s0 = inlined_call_operand.vmem [shape: f32[8,80], index: 0, kind: input, shape index: {}]
  %s1 = inlined_call_operand.vmem [shape: bf16[80,128], index: 1, kind: input, shape index: {}]
  %s2 = inlined_call_operand.vmem [shape: bf16[80,128], index: 2, kind: input, shape index: {}]
  %s3 = inlined_call_operand.vmem [shape: f32[1,128], index: 3, kind: input, shape index: {}]
  %s4 = inlined_call_operand.hbm [shape: f32[8,128], index: 4, kind: output, shape index: {}]
  %s5 = sld [smem:[#allocation0]]
  $region26: #{kan_forward.1} parent=0
    _
  %s7 = ssub.s32 1, %s5
  %s8 = scalar_select 0, %s7, %s5
  $region1: #{kan_forward.1} parent=0
    #allocation2 [shape = 'u8[4096]{0}', space=vmem, size = 0x1000, scoped, tag = 'output window, operand 0, single buffered']
    #allocation3 [shape = 's32[1]{0}', space=sflag, size = 0x4, scoped, tag = 'scoped memory for kan_forward.1']
    %9 = vsyncpa [#allocation3], 0
    // Predicated region
    $region2: #{kan_forward.1} parent=1 // pred_check
      _
    $region3: #{kan_forward.1} parent=1 // pred_check_branch
      %11 = sbr.rel (0) target = $region5
    $region4: #{kan_forward.1} parent=1 // pred_region
      _
    $region5: #{kan_forward.1} parent=1 // pred_fallthru
      _
    // Predicated region
    $region6: #{kan_forward.1} parent=1 // pred_check
      _
    $region7: #{kan_forward.1} parent=1 // pred_check_branch
      %13 = sbr.rel (0) target = $region9
    $region8: #{kan_forward.1} parent=1 // pred_region
      _
    $region9: #{kan_forward.1} parent=1 // pred_fallthru
      _
    // Predicated region
    $region10: #{kan_forward.1} parent=1 // pred_check
      _
    $region11: #{kan_forward.1} parent=1 // pred_check_branch
      %15 = sbr.rel (0) target = $region13
    $region12: #{kan_forward.1} parent=1 // pred_region
      _
    $region13: #{kan_forward.1} parent=1 // pred_fallthru
      _
    // Predicated region
    $region14: #{kan_forward.1} parent=1 // pred_check
      _
    $region15: #{kan_forward.1} parent=1 // pred_check_branch
      %17 = sbr.rel (0) target = $region17
    $region16: #{kan_forward.1} parent=1 // pred_region
      _
    $region17: #{kan_forward.1} parent=1 // pred_fallthru
      _
    %v19 = vld [vmem:[%s0] sm:$0xff]
    %v20 = vand.u32 2147483647, %v19
    %vm21 = vcmp.le.f32.partialorder %v20, 0.7853982
    %vm22 = vcmp.lt.s32.totalorder %v19, 0
    %v23 = vand.u32 %v19, 2139095040
    %v24 = vshrl.u32 %v23, 23
    %v25 = vsub.s32 %v24, 127
    %v26 = vand.u32 2147483647, %v19
    %v27 = vand.u32 %v26, 8388607
    %v28 = vor.u32 %v27, 8388608
    %v29 = vsub.s32 0, %v28
    %v30 = vadd.s32 %v25, 1
    %vm31 = vcmp.gt.s32.totalorder %v30, 0
    %v32 = vsel %vm31, %v30, 0
    %v33 = vshrl.u32 %v32, 5
    %v34 = vand.u32 %v32, 31
    %v35 = vsub.s32 32, %v34
    %v36 = vshrl.u32 683565275, %v35
    %v37 = vshll.u32 683565275, %v34
    %v38 = vshrl.u32 2475754826, %v35
    %v39 = vor.u32 %v37, %v38
    %v40 = vshll.u32 2475754826, %v34
    %v41 = vshrl.u32 2131351028, %v35
    %v42 = vor.u32 %v40, %v41
    %v43 = vshll.u32 2131351028, %v34
    %v44 = vshrl.u32 2102212464, %v35
    %v45 = vor.u32 %v43, %v44
    %v46 = vshll.u32 2102212464, %v34
    %v47 = vshrl.u32 920167782, %v35
    %v48 = vor.u32 %v46, %v47
    %v49 = vshll.u32 920167782, %v34
    %v50 = vshrl.u32 1326507024, %v35
    %v51 = vor.u32 %v49, %v50
    %vm52 = vcmp.lt.s32.totalorder %v33, 1
    %vm53 = vcmp.lt.s32.totalorder %v33, 2
    %vm54 = vcmp.lt.s32.totalorder %v33, 3
    %vm55 = vcmp.lt.s32.totalorder %v33, 4
    %v56 = vsel %vm52, %v36, %v39
    %v57 = vsel %vm55, %v45, 2102212464
    %v58 = vsel %vm54, %v42, %v57
    %v59 = vsel %vm53, %v56, %v58
    %v60 = vsel %vm52, %v39, %v42
    %v61 = vsel %vm55, %v48, 920167782
    %v62 = vsel %vm54, %v45, %v61
    %v63 = vsel %vm53, %v60, %v62
    %v64 = vsel %vm52, %v42, %v45
    %v65 = vsel %vm55, %v51, 1326507024
    %v66 = vsel %vm54, %v48, %v65
    %v67 = vsel %vm53, %v64, %v66
    %v68 = vshll.u32 %v28, 8
    %v69 = vand.u32 %v68, 65535
    %v70 = vshrl.u32 %v68, 16
    %v71 = vand.u32 %v67, 65535
    %v72 = vshrl.u32 %v67, 16
    %v73 = vmul.u32 %v69, %v71
    %v74 = vmul.u32 %v69, %v72
    %v75 = vmul.u32 %v70, %v71
    %v76 = vmul.u32 %v70, %v72
    %v77 = vshll.u32 %v74, 16
    %v78 = vshrl.u32 %v74, 16
    %v79 = vshll.u32 %v75, 16
    %v80 = vshrl.u32 %v75, 16
    %vm81 = vc.u32 %v73, %v77
    %v82 = vsel %vm81, 1, 0
    %v83 = vadd.s32 %v73, %v77
    %v84 = vadd.s32 %v76, %v82
    %vm85 = vc.u32 %v83, %v79
    %v86 = vsel %vm85, 1, 0
    %v87 = vadd.s32 %v83, %v79
    %v88 = vadd.s32 %v84, %v86
    %v89 = vadd.s32 %v88, %v78
    %v90 = vadd.s32 %v89, %v80
    %v91 = vand.u32 %v68, 65535
    %v92 = vshrl.u32 %v68, 16
    %v93 = vand.u32 %v63, 65535
    %v94 = vshrl.u32 %v63, 16
    %v95 = vmul.u32 %v91, %v93
    %v96 = vmul.u32 %v91, %v94
    %v97 = vmul.u32 %v92, %v93
    %v98 = vmul.u32 %v92, %v94
    %v99 = vshll.u32 %v96, 16
    %v100 = vshrl.u32 %v96, 16
    %v101 = vshll.u32 %v97, 16
    %v102 = vshrl.u32 %v97, 16
    %vm103 = vc.u32 %v95, %v99
    %v104 = vsel %vm103, 1, 0
    %v105 = vadd.s32 %v95, %v99
    %v106 = vadd.s32 %v98, %v104
    %vm107 = vc.u32 %v105, %v101
    %v108 = vsel %vm107, 1, 0
    %v109 = vadd.s32 %v105, %v101
    %v110 = vadd.s32 %v106, %v108
    %v111 = vadd.s32 %v110, %v100
    %v112 = vadd.s32 %v111, %v102
    %v113 = vmul.u32 %v68, %v59
    %v114 = vadd.s32 %v90, %v109
    %vm115 = vc.u32 %v90, %v109
    %v116 = vadd.s32 %v112, 1
    %v117 = vsel %vm115, %v116, %v112
    %v118 = vadd.s32 %v113, %v117
    %v119 = vadd.s32 %v118, 536870912
    %v120 = vshrl.u32 %v119, 30
    %v121 = vshll.u32 %v120, 30
    %v122 = vsub.s32 %v118, %v121
    %vm123 = vcmp.lt.s32.totalorder %v122, 0
    %v124 = vsub.s32 0, %v122
    %v125 = vsel %vm123, %v124, %v122
    %v126 = vclz %v125
    %v127 = vsub.s32 %v126, 2
    %vm128 = vcmp.gt.s32.totalorder 0, %v127
    %v129 = vsel %vm128, 0, %v127
    %v130 = vsub.s32 32, %v129
    %v131 = vshll.u32 %v122, %v129
    %v132 = vshrl.u32 %v114, %v130
    %v133 = vor.u32 %v131, %v132
    %v134 = vsub.s32 4294967266, %v129
    %v135 = vadd.s32 %v134, 127
    %v136 = vshll.u32 %v135, 23
    %v137 = vor.u32 4788187, %v136
    %v138 = vand.u32 2147483647, %v137
    %v140 = vcvt.s32.f32 %v133
    %v141 = vmul.f32 %v140, %v138
    %v142 = vxor.u32 %v141, 2147483648
    %v143 = vsel %vm22, %v142, %v141
    %v144 = vsub.s32 4, %v120
    %v145 = vsel %vm22, %v144, %v120
    %v146 = vsel %vm21, %v19, %v143
    %v147 = vsel %vm21, 0, %v145
    %v148 = vmul.f32 %v146, %v146
    %v149 = vmul.f32 %v148, -0.001358992
    %v150 = vadd.f32 %v149, 0.041655596
    %v151 = vmul.f32 %v148, %v150
    %v152 = vadd.f32 %v151, -0.4999988
    %v153 = vmul.f32 %v148, %v152
    %v154 = vadd.f32 1.0, %v153
    %v155 = vmul.f32 %v146, %v146
    %v156 = vmul.f32 %v155, -0.00019511016
    %v157 = vadd.f32 %v156, 0.008332121
    %v158 = vmul.f32 %v155, %v157
    %v159 = vadd.f32 %v158, -0.16666654
    %v160 = vmul.f32 %v155, %v159
    %v161 = vadd.f32 %v160, 1.0
    %v162 = vmul.f32 %v161, %v146
    %vm163 = vweird.f32 %v19
    %v164 = vand.u32 %v147, 3
    %vm165 = vcmp.lt.s32.totalorder %v164, 2
    %vm166 = vcmp.eq.s32.totalorder %v164, 0
    %v167 = vxor.u32 %v162, 2147483648
    %v168 = vsel %vm166, %v154, %v167
    %vm169 = vcmp.eq.s32.totalorder %v164, 2
    %v170 = vxor.u32 %v154, 2147483648
    %v171 = vsel %vm169, %v170, %v162
    %v172 = vsel %vm165, %v168, %v171
    %v173 = vsel %vm163, nan, %v172
    %v174 = vpack.c.bf16 %v173, %v173
    %v175 = vand.u32 2147483647, %v19
    %vm176 = vcmp.le.f32.partialorder %v175, 0.7853982
    %vm177 = vcmp.lt.s32.totalorder %v19, 0
    %v178 = vand.u32 %v19, 2139095040
    %v179 = vshrl.u32 %v178, 23
    %v180 = vsub.s32 %v179, 127
    %v181 = vand.u32 2147483647, %v19
    %v182 = vand.u32 %v181, 8388607
    %v183 = vor.u32 %v182, 8388608
    %v184 = vsub.s32 0, %v183
    %v185 = vadd.s32 %v180, 1
    %vm186 = vcmp.gt.s32.totalorder %v185, 0
    %v187 = vsel %vm186, %v185, 0
    %v188 = vshrl.u32 %v187, 5
    %v189 = vand.u32 %v187, 31
    %v190 = vsub.s32 32, %v189
    %v191 = vshrl.u32 683565275, %v190
    %v192 = vshll.u32 683565275, %v189
    %v193 = vshrl.u32 2475754826, %v190
    %v194 = vor.u32 %v192, %v193
    %v195 = vshll.u32 2475754826, %v189
    %v196 = vshrl.u32 2131351028, %v190
    %v197 = vor.u32 %v195, %v196
    %v198 = vshll.u32 2131351028, %v189
    %v199 = vshrl.u32 2102212464, %v190
    %v200 = vor.u32 %v198, %v199
    %v201 = vshll.u32 2102212464, %v189
    %v202 = vshrl.u32 920167782, %v190
    %v203 = vor.u32 %v201, %v202
    %v204 = vshll.u32 920167782, %v189
    %v205 = vshrl.u32 1326507024, %v190
    %v206 = vor.u32 %v204, %v205
    %vm207 = vcmp.lt.s32.totalorder %v188, 1
    %vm208 = vcmp.lt.s32.totalorder %v188, 2
    %vm209 = vcmp.lt.s32.totalorder %v188, 3
    %vm210 = vcmp.lt.s32.totalorder %v188, 4
    %v211 = vsel %vm207, %v191, %v194
    %v212 = vsel %vm210, %v200, 2102212464
    %v213 = vsel %vm209, %v197, %v212
    %v214 = vsel %vm208, %v211, %v213
    %v215 = vsel %vm207, %v194, %v197
    %v216 = vsel %vm210, %v203, 920167782
    %v217 = vsel %vm209, %v200, %v216
    %v218 = vsel %vm208, %v215, %v217
    %v219 = vsel %vm207, %v197, %v200
    %v220 = vsel %vm210, %v206, 1326507024
    %v221 = vsel %vm209, %v203, %v220
    %v222 = vsel %vm208, %v219, %v221
    %v223 = vshll.u32 %v183, 8
    %v224 = vand.u32 %v223, 65535
    %v225 = vshrl.u32 %v223, 16
    %v226 = vand.u32 %v222, 65535
    %v227 = vshrl.u32 %v222, 16
    %v228 = vmul.u32 %v224, %v226
    %v229 = vmul.u32 %v224, %v227
    %v230 = vmul.u32 %v225, %v226
    %v231 = vmul.u32 %v225, %v227
    %v232 = vshll.u32 %v229, 16
    %v233 = vshrl.u32 %v229, 16
    %v234 = vshll.u32 %v230, 16
    %v235 = vshrl.u32 %v230, 16
    %vm236 = vc.u32 %v228, %v232
    %v237 = vsel %vm236, 1, 0
    %v238 = vadd.s32 %v228, %v232
    %v239 = vadd.s32 %v231, %v237
    %vm240 = vc.u32 %v238, %v234
    %v241 = vsel %vm240, 1, 0
    %v242 = vadd.s32 %v238, %v234
    %v243 = vadd.s32 %v239, %v241
    %v244 = vadd.s32 %v243, %v233
    %v245 = vadd.s32 %v244, %v235
    %v246 = vand.u32 %v223, 65535
    %v247 = vshrl.u32 %v223, 16
    %v248 = vand.u32 %v218, 65535
    %v249 = vshrl.u32 %v218, 16
    %v250 = vmul.u32 %v246, %v248
    %v251 = vmul.u32 %v246, %v249
    %v252 = vmul.u32 %v247, %v248
    %v253 = vmul.u32 %v247, %v249
    %v254 = vshll.u32 %v251, 16
    %v255 = vshrl.u32 %v251, 16
    %v256 = vshll.u32 %v252, 16
    %v257 = vshrl.u32 %v252, 16
    %vm258 = vc.u32 %v250, %v254
    %v259 = vsel %vm258, 1, 0
    %v260 = vadd.s32 %v250, %v254
    %v261 = vadd.s32 %v253, %v259
    %vm262 = vc.u32 %v260, %v256
    %v263 = vsel %vm262, 1, 0
    %v264 = vadd.s32 %v260, %v256
    %v265 = vadd.s32 %v261, %v263
    %v266 = vadd.s32 %v265, %v255
    %v267 = vadd.s32 %v266, %v257
    %v268 = vmul.u32 %v223, %v214
    %v269 = vadd.s32 %v245, %v264
    %vm270 = vc.u32 %v245, %v264
    %v271 = vadd.s32 %v267, 1
    %v272 = vsel %vm270, %v271, %v267
    %v273 = vadd.s32 %v268, %v272
    %v274 = vadd.s32 %v273, 536870912
    %v275 = vshrl.u32 %v274, 30
    %v276 = vshll.u32 %v275, 30
    %v277 = vsub.s32 %v273, %v276
    %vm278 = vcmp.lt.s32.totalorder %v277, 0
    %v279 = vsub.s32 0, %v277
    %v280 = vsel %vm278, %v279, %v277
    %v281 = vclz %v280
    %v282 = vsub.s32 %v281, 2
    %vm283 = vcmp.gt.s32.totalorder 0, %v282
    %v284 = vsel %vm283, 0, %v282
    %v285 = vsub.s32 32, %v284
    %v286 = vshll.u32 %v277, %v284
    %v287 = vshrl.u32 %v269, %v285
    %v288 = vor.u32 %v286, %v287
    %v289 = vsub.s32 4294967266, %v284
    %v290 = vadd.s32 %v289, 127
    %v291 = vshll.u32 %v290, 23
    %v292 = vor.u32 4788187, %v291
    %v293 = vand.u32 2147483647, %v292
    %v295 = vcvt.s32.f32 %v288
    %v296 = vmul.f32 %v295, %v293
    %v297 = vxor.u32 %v296, 2147483648
    %v298 = vsel %vm177, %v297, %v296
    %v299 = vsub.s32 4, %v275
    %v300 = vsel %vm177, %v299, %v275
    %v301 = vsel %vm176, %v19, %v298
    %v302 = vsel %vm176, 0, %v300
    %v303 = vmul.f32 %v301, %v301
    %v304 = vmul.f32 %v303, -0.001358992
    %v305 = vadd.f32 %v304, 0.041655596
    %v306 = vmul.f32 %v303, %v305
    %v307 = vadd.f32 %v306, -0.4999988
    %v308 = vmul.f32 %v303, %v307
    %v309 = vadd.f32 1.0, %v308
    %v310 = vmul.f32 %v301, %v301
    %v311 = vmul.f32 %v310, -0.00019511016
    %v312 = vadd.f32 %v311, 0.008332121
    %v313 = vmul.f32 %v310, %v312
    %v314 = vadd.f32 %v313, -0.16666654
    %v315 = vmul.f32 %v310, %v314
    %v316 = vadd.f32 %v315, 1.0
    %v317 = vmul.f32 %v316, %v301
    %vm318 = vweird.f32 %v19
    %v319 = vadd.s32 %v302, 3
    %v320 = vand.u32 %v319, 3
    %vm321 = vcmp.lt.s32.totalorder %v320, 2
    %vm322 = vcmp.eq.s32.totalorder %v320, 0
    %v323 = vxor.u32 %v317, 2147483648
    %v324 = vsel %vm322, %v309, %v323
    %vm325 = vcmp.eq.s32.totalorder %v320, 2
    %v326 = vxor.u32 %v309, 2147483648
    %v327 = vsel %vm325, %v326, %v317
    %v328 = vsel %vm321, %v324, %v327
    %v329 = vsel %vm318, nan, %v328
    %v330 = vpack.c.bf16 %v329, %v329
    %v331 = vld [vmem:[%s1] sm:$0xf]
    %v332 = vld [vmem:[%s1 + $0x4] sm:$0xf]
    %v333 = vld [vmem:[%s1 + $0x8] sm:$0xf]
    %v334 = vld [vmem:[%s1 + $0xc] sm:$0xf]
    %v335 = vld [vmem:[%s1 + $0x10] sm:$0xf]
    %v336 = vld [vmem:[%s1 + $0x14] sm:$0xf]
    %v337 = vld [vmem:[%s1 + $0x18] sm:$0xf]
    %v338 = vld [vmem:[%s1 + $0x1c] sm:$0xf]
    %v339 = vld [vmem:[%s1 + $0x20] sm:$0xf]
    %v340 = vld [vmem:[%s1 + $0x24] sm:$0xf]
    %v341 = vld [vmem:[%s2] sm:$0xf]
    %v342 = vld [vmem:[%s2 + $0x4] sm:$0xf]
    %v343 = vld [vmem:[%s2 + $0x8] sm:$0xf]
    %v344 = vld [vmem:[%s2 + $0xc] sm:$0xf]
    %v345 = vld [vmem:[%s2 + $0x10] sm:$0xf]
    %v346 = vld [vmem:[%s2 + $0x14] sm:$0xf]
    %v347 = vld [vmem:[%s2 + $0x18] sm:$0xf]
    %v348 = vld [vmem:[%s2 + $0x1c] sm:$0xf]
    %v349 = vld [vmem:[%s2 + $0x20] sm:$0xf]
    %v350 = vld [vmem:[%s2 + $0x24] sm:$0xf]
    %v361 = vunpack.c.l.b16 %v341
    %v362 = vunpack.c.l.b16 %v342
    %v363 = vunpack.c.l.b16 %v343
    %v364 = vunpack.c.l.b16 %v344
    %v365 = vunpack.c.l.b16 %v345
    %v366 = vunpack.c.l.b16 %v346
    %v367 = vunpack.c.l.b16 %v347
    %v368 = vunpack.c.l.b16 %v348
    %v369 = vunpack.c.l.b16 %v349
    %v370 = vunpack.c.l.b16 %v350
    %v371 = vpack.c.b16 %v362, %v361
    %v372 = vpack.c.b16 %v364, %v363
    %v373 = vpack.c.b16 %v366, %v365
    %v374 = vpack.c.b16 %v368, %v367
    %v375 = vpack.c.b16 %v370, %v369
    %vm381 = vcmask 654336
    %v383 = vsel %vm381, %v330, 0
    %385 = vmatpush.bf16.msra.mxu0 0
    %386 = vmatpush.bf16.msra.mxu0 0
    %387 = vmatpush.bf16.msra.mxu0 0
    %388 = vmatpush.bf16.msra.mxu0 %v375
    %389 = vmatpush.bf16.msra.mxu0 %v374
    %390 = vmatpush.bf16.msra.mxu0 %v373
    %391 = vmatpush.bf16.msra.mxu0 %v372
    %392 = vmatpush.bf16.msra.mxu0 %v371
    %393 = vmatmul.bf16.gmra.mxu0 %v383
    %v394 = vpop.f32.mrf.mxu0
    %v395 = vadd.f32 0.0, %v394
    %v396 = vpop.f32.mrf.mxu0
    %397 = vdwg.mxu0
    %v408 = vunpack.c.l.b16 %v331
    %v409 = vunpack.c.l.b16 %v332
    %v410 = vunpack.c.l.b16 %v333
    %v411 = vunpack.c.l.b16 %v334
    %v412 = vunpack.c.l.b16 %v335
    %v413 = vunpack.c.l.b16 %v336
    %v414 = vunpack.c.l.b16 %v337
    %v415 = vunpack.c.l.b16 %v338
    %v416 = vunpack.c.l.b16 %v339
    %v417 = vunpack.c.l.b16 %v340
    %v418 = vpack.c.b16 %v409, %v408
    %v419 = vpack.c.b16 %v411, %v410
    %v420 = vpack.c.b16 %v413, %v412
    %v421 = vpack.c.b16 %v415, %v414
    %v422 = vpack.c.b16 %v417, %v416
    %v429 = vsel %vm381, %v174, 0
    %431 = vmatpush.bf16.msra.mxu0 0
    %432 = vmatpush.bf16.msra.mxu0 0
    %433 = vmatpush.bf16.msra.mxu0 0
    %434 = vmatpush.bf16.msra.mxu0 %v422
    %435 = vmatpush.bf16.msra.mxu0 %v421
    %436 = vmatpush.bf16.msra.mxu0 %v420
    %437 = vmatpush.bf16.msra.mxu0 %v419
    %438 = vmatpush.bf16.msra.mxu0 %v418
    %439 = vmatmul.bf16.gmra.mxu0 %v429
    %v440 = vpop.f32.mrf.mxu0
    %v441 = vadd.f32 %v395, %v440
    %v442 = vpop.f32.mrf.mxu0
    %443 = vdwg.mxu0
    %v444 = vld [vmem:[%s3] sm:$0x1]
    %v446 = vperm.slane %v444, 0
    %v448 = vadd.f32 %v441, %v446
    %449 = vst [vmem:[#allocation2] sm:$0xff] %v448
    // Predicated region
    $region18: #{kan_forward.1} parent=1 // pred_check
      _
    $region19: #{kan_forward.1} parent=1 // pred_check_branch
      %451 = sbr.rel (0) target = $region21
    $region20: #{kan_forward.1} parent=1 // pred_region
      %453 = vsyncadd [#allocation3], 0
      %s455 = sshll.u32 [#allocation2], 4
      %s456 = int_to_ptr.vmem [resolvable:$true] %s455
      %s457 = sshll.u32 %s4, 4
      %s458 = int_to_ptr.hbm [resolvable:$true] %s457
      %460 = dma.vmem_to_hbm [thread:$0]  %s456, 128, %s458, [#allocation3]
    $region21: #{kan_forward.1} parent=1 // pred_fallthru
      _
    // Predicated region
    $region22: #{kan_forward.1} parent=1 // pred_check
      _
    $region23: #{kan_forward.1} parent=1 // pred_check_branch
      %462 = sbr.rel (0) target = $region25
    $region24: #{kan_forward.1} parent=1 // pred_region
      %464 = dma.done [#allocation3], 128
    $region25: #{kan_forward.1} parent=1 // pred_fallthru
      _
    %465 = vsyncpa [#allocation3], 1

</llo_original>
